<compile_context>
chip_gen: v7x
topology: tpu7x:2x2x1
jax: 0.10.0
libtpu: 0.0.40
codegen_flags: <defaults>
</compile_context>

<pallas_src>
import functools

import jax
import jax.numpy as jnp
from jax.experimental import pallas as pl
from jax.experimental.pallas import tpu as pltpu


def _round_up(x, m):
    return ((x + m - 1) // m) * m


def _cdiv(a, b):
    return -(-a // b)


def _vmem_capacity_bytes():
    try:
        return int(pltpu.get_tpu_info().vmem_capacity_bytes)
    except Exception:
        return 64 << 20  # conservative fallback: v7x per-TensorCore VMEM


def _vmem_footprint(tile_m, tile_k, hidden, latp, in_item, w_item, mxu_item, out_item):
    """Rough per-step VMEM bytes: double-buffered blocks + scratch + temporaries."""
    fp = 2 * tile_m * tile_k * in_item                      # x blocks (orig dtype)
    fp += 2 * tile_k * hidden * w_item                      # w1 blocks
    fp += 2 * hidden * latp * w_item                        # w2 blocks
    fp += 2 * (hidden + latp) * 4                           # biases
    fp += 2 * tile_m * latp * out_item                      # out blocks
    fp += tile_m * hidden * 4                               # f32 accumulator scratch
    # in-kernel temporaries: casts of x/w1/w2/h + f32 h + f32 out
    fp += tile_m * tile_k * mxu_item
    fp += (tile_k * hidden + hidden * latp) * mxu_item
    fp += tile_m * hidden * (4 + mxu_item)
    fp += tile_m * latp * 4
    return fp


def shared_encoder_kernel(x_ref, w1_ref, b1_ref, w2_ref, b2_ref, o_ref, acc_ref,
                          *, mxu_dtype):
    k = pl.program_id(1)

    @pl.when(k == 0)
    def _():
        acc_ref[...] = jnp.zeros_like(acc_ref)

    # Linear 1 partial: (tile_m, tile_k) @ (tile_k, 128) on the MXU, f32 accumulation.
    # Cast to the MXU dtype *inside* the kernel (no wrapper-side HBM convert pass).
    acc_ref[...] += jnp.dot(
        x_ref[...].astype(mxu_dtype),
        w1_ref[...].astype(mxu_dtype),
        preferred_element_type=jnp.float32)

    @pl.when(k == pl.num_programs(1) - 1)
    def _():
        # Bias + ReLU in f32 on the VPU (no bf16 elementwise — keeps v5e happy).
        h = jnp.maximum(acc_ref[...] + b1_ref[...], 0.0)
        # Linear 2: (tile_m, 128) @ (128, lat_padded), f32 accumulation.
        out = jnp.dot(h.astype(mxu_dtype),
                      w2_ref[...].astype(mxu_dtype),
                      preferred_element_type=jnp.float32)
        o_ref[...] = (out + b2_ref[...]).astype(o_ref.dtype)


@functools.partial(jax.jit,
                   static_argnames=("tile_m", "tile_k", "use_bf16", "out_dtype"))
def shared_encoder(x, w1, b1, w2, b2, *, tile_m=None, tile_k=None,
                   use_bf16=True, out_dtype=None):
    batch, input_dim = x.shape
    hidden = w1.shape[1]
    latent = w2.shape[1]
    if out_dtype is None:
        out_dtype = x.dtype
    out_dtype = jnp.dtype(out_dtype)
    mxu_dtype = jnp.bfloat16 if use_bf16 else x.dtype

    b1 = b1.reshape(1, hidden)
    b2 = b2.reshape(1, latent)

    # --- Lane-dense output: pad latent up to a multiple of 128 lanes (tiny pads,
    #     weights/biases only — x is never padded or copied in HBM). -----------
    lat_padded = _round_up(latent, 128)
    if lat_padded != latent:
        w2 = jnp.pad(w2, ((0, 0), (0, lat_padded - latent)))
        b2 = jnp.pad(b2, ((0, 0), (0, lat_padded - latent)))

    # --- K-split selection (bounds VMEM residency for large input_dim). -------
    if tile_k is None:
        tile_k = input_dim
        if input_dim > 2048:
            for cand in (1024, 512, 256, 128):
                if input_dim % cand == 0:
                    tile_k = cand
                    break
        # TODO(synk): for huge input_dim not divisible by 128, pad K in HBM once
        # (amortized across calls) so the K-split can still bound VMEM residency.
    assert input_dim % tile_k == 0, "tile_k must divide input_dim"
    num_k = input_dim // tile_k

    in_item = jnp.dtype(x.dtype).itemsize
    w_item = jnp.dtype(w1.dtype).itemsize
    mxu_item = jnp.dtype(mxu_dtype).itemsize
    out_item = out_dtype.itemsize

    def footprint(tm):
        return _vmem_footprint(tm, tile_k, hidden, lat_padded,
                               in_item, w_item, mxu_item, out_item)

    vmem_cap = _vmem_capacity_bytes()
    budget = int(0.70 * vmem_cap)

    # bf16 packs 16 rows per vreg sublane pair — use 16-row alignment when it fits.
    row_align = 16 if (use_bf16 and batch >= 16) else 8

    # --- tile_m: per-generation target, shrunk (not capped) to fit VMEM. ------
    if tile_m is None:
        tm_target = 512
        if vmem_cap >= (96 << 20) and footprint(1024) <= budget:
            tm_target = 1024                    # v5e / v6e: 128 MiB VMEM headroom
    else:
        tm_target = _round_up(tile_m, row_align)
    while tm_target > row_align and footprint(tm_target) > budget:
        tm_target //= 2
    tm_target = max(_round_up(tm_target, row_align), row_align)

    # --- M grid: cdiv (no batch padding); >= 2 steps so both v7x TCs get work. -
    num_m = _cdiv(batch, tm_target)
    if batch >= 2 * row_align:
        num_m = max(num_m, 2)
    tile_m = _round_up(_cdiv(batch, num_m), row_align)
    num_m = _cdiv(batch, tile_m)

    fp = footprint(tile_m)
    # Always set the scoped-VMEM limit explicitly (v5e default is only 16 MiB).
    vmem_limit = min(max(int(fp * 1.25) + (2 << 20), 32 << 20), int(0.9 * vmem_cap))

    flops = 2 * batch * hidden * (input_dim + lat_padded)
    bytes_accessed = (batch * input_dim * in_item
                      + num_m * input_dim * hidden * w_item
                      + hidden * lat_padded * w_item
                      + (hidden + lat_padded) * 4
                      + batch * lat_padded * out_item)

    out = pl.pallas_call(
        functools.partial(shared_encoder_kernel, mxu_dtype=mxu_dtype),
        out_shape=jax.ShapeDtypeStruct((batch, lat_padded), out_dtype),
        grid_spec=pltpu.PrefetchScalarGridSpec(
            num_scalar_prefetch=0,
            grid=(num_m, num_k),
            in_specs=[
                pl.BlockSpec((tile_m, tile_k), lambda i, k: (i, k)),
                pl.BlockSpec((tile_k, hidden), lambda i, k: (k, 0)),
                pl.BlockSpec((1, hidden), lambda i, k: (0, 0)),
                pl.BlockSpec((hidden, lat_padded), lambda i, k: (0, 0)),
                pl.BlockSpec((1, lat_padded), lambda i, k: (0, 0)),
            ],
            out_specs=pl.BlockSpec((tile_m, lat_padded), lambda i, k: (i, 0)),
            scratch_shapes=[pltpu.VMEM((tile_m, hidden), jnp.float32)],
        ),
        compiler_params=pltpu.CompilerParams(
            dimension_semantics=("parallel", "arbitrary"),
            vmem_limit_bytes=vmem_limit,
        ),
        cost_estimate=pl.CostEstimate(
            flops=flops, transcendentals=0, bytes_accessed=bytes_accessed),
    )(x, w1, b1, w2, b2)

    if lat_padded != latent:
        out = out[:, :latent]
    return out


def init_params(key, input_dim, latent_dim=64, hidden=128, dtype=jnp.float32):
    """Deterministic init mimicking PyTorch's Linear (uniform +/- 1/sqrt(fan_in))."""
    k1, k2, k3, k4 = jax.random.split(key, 4)
    bound1 = 1.0 / jnp.sqrt(input_dim)
    bound2 = 1.0 / jnp.sqrt(hidden)
    w1 = jax.random.uniform(k1, (input_dim, hidden), dtype, -bound1, bound1)
    b1 = jax.random.uniform(k2, (1, hidden), dtype, -bound1, bound1)
    w2 = jax.random.uniform(k3, (hidden, latent_dim), dtype, -bound2, bound2)
    b2 = jax.random.uniform(k4, (1, latent_dim), dtype, -bound2, bound2)
    return w1, b1, w2, b2


def _reference(x, w1, b1, w2, b2):
    return jnp.maximum(x @ w1 + b1, 0.0) @ w2 + b2


if __name__ == "__main__":
    key = jax.random.PRNGKey(0)

    def check(batch, input_dim, latent, *, use_bf16, tile_k=None, tol=1e-4):
        kk = jax.random.fold_in(key, batch * 1000 + input_dim)
        kx, kp = jax.random.split(kk)
        x = jax.random.normal(kx, (batch, input_dim), jnp.float32)
        w1, b1, w2, b2 = init_params(kp, input_dim, latent)
        ref = _reference(x, w1, b1, w2, b2)
        out = jax.block_until_ready(
            shared_encoder(x, w1, b1, w2, b2, use_bf16=use_bf16, tile_k=tile_k))
        assert out.shape == (batch, latent), (out.shape, (batch, latent))
        assert jnp.allclose(out, ref, atol=tol, rtol=tol), (
            f"mismatch: batch={batch} in={input_dim} bf16={use_bf16} "
            f"max_err={float(jnp.max(jnp.abs(out - ref)))}")

    # Small shapes (module: Linear(in,128) -> ReLU -> Linear(128,64)).
    check(8, 32, 64, use_bf16=False, tol=1e-4)          # exact f32 path
    check(8, 32, 64, use_bf16=True, tol=3e-2)           # bf16 MXU, f32 accumulation
    check(13, 32, 64, use_bf16=False, tol=1e-4)         # ragged batch (partial M block)
    check(40, 256, 64, use_bf16=False, tile_k=128, tol=1e-4)   # K-split (2 k-steps) + 2 M tiles
    check(40, 256, 64, use_bf16=True, tile_k=128, tol=8e-2)    # K-split, bf16 path

    print("KERNEL_OK")
</pallas_src>

<mosaic_0001>
module attributes {stable_mosaic.version = 11 : i64} {
  func.func @shared_encoder_kernel(%arg0: i32, %arg1: i32, %arg2: memref<8x32xf32, #tpu.memory_space<vmem>>, %arg3: memref<32x128xf32, #tpu.memory_space<vmem>>, %arg4: memref<1x128xf32, #tpu.memory_space<vmem>>, %arg5: memref<128x128xf32, #tpu.memory_space<vmem>>, %arg6: memref<1x128xf32, #tpu.memory_space<vmem>>, %arg7: memref<8x128xf32, #tpu.memory_space<vmem>>, %arg8: memref<8x128xf32, #tpu.memory_space<vmem>>) attributes {dimension_semantics = [#tpu.dimension_semantics<parallel>, #tpu.dimension_semantics<arbitrary>], iteration_bounds = array<i64: 1, 1>, scalar_prefetch = 0 : i64, scratch_operands = 1 : i64, tpu.core_type = #tpu.core_type<tc>, window_params = [{transform_indices = @transform_0, window_bounds = array<i64: 8, 32>}, {transform_indices = @transform_1, window_bounds = array<i64: 32, 128>}, {pipeline_mode = #tpu.pipeline_mode<synchronous>, transform_indices = @transform_2, window_bounds = array<i64: 1, 128>}, {pipeline_mode = #tpu.pipeline_mode<synchronous>, transform_indices = @transform_3, window_bounds = array<i64: 128, 128>}, {pipeline_mode = #tpu.pipeline_mode<synchronous>, transform_indices = @transform_4, window_bounds = array<i64: 1, 128>}, {transform_indices = @transform_5, window_bounds = array<i64: 8, 128>}]} {
    %c0_i32 = arith.constant 0 : i32
    %0 = arith.cmpi eq, %arg1, %c0_i32 : i32
    %1 = arith.extui %0 : i1 to i32
    %c0_i32_0 = arith.constant 0 : i32
    %2 = arith.cmpi ne, %1, %c0_i32_0 : i32
    scf.if %2 {
      %cst_10 = arith.constant 0.000000e+00 : f32
      %12 = vector.broadcast %cst_10 : f32 to vector<8x128xf32>
      %c0_11 = arith.constant 0 : index
      %c0_12 = arith.constant 0 : index
      %13 = vector.load %arg8[%c0_11, %c0_12] : memref<8x128xf32, #tpu.memory_space<vmem>>, vector<8x128xf32>
      tpu.vector_store %arg8[%c0_11, %c0_12], %12 {strides = array<i32>} : memref<8x128xf32, #tpu.memory_space<vmem>>, vector<8x128xf32>,
    } else {
    }
    %c0 = arith.constant 0 : index
    %c0_1 = arith.constant 0 : index
    %3 = vector.load %arg8[%c0, %c0_1] : memref<8x128xf32, #tpu.memory_space<vmem>>, vector<8x128xf32>
    %c0_2 = arith.constant 0 : index
    %c0_3 = arith.constant 0 : index
    %4 = vector.load %arg2[%c0_2, %c0_3] : memref<8x32xf32, #tpu.memory_space<vmem>>, vector<8x32xf32>
    %c0_4 = arith.constant 0 : index
    %c0_5 = arith.constant 0 : index
    %5 = vector.load %arg3[%c0_4, %c0_5] : memref<32x128xf32, #tpu.memory_space<vmem>>, vector<32x128xf32>
    %cst = arith.constant dense<0.000000e+00> : vector<8x128xf32>
    %6 = tpu.matmul %4, %5, %cst {dimension_numbers = #tpu.dot_dimension_numbers<[1], [0], [0], [1], [0, 0, 1, 1], [], []>} : vector<8x32xf32>, vector<32x128xf32>, vector<8x128xf32> -> vector<8x128xf32>
    %7 = arith.addf %3, %6 : vector<8x128xf32>
    %c0_6 = arith.constant 0 : index
    %c0_7 = arith.constant 0 : index
    %8 = vector.load %arg8[%c0_6, %c0_7] : memref<8x128xf32, #tpu.memory_space<vmem>>, vector<8x128xf32>
    tpu.vector_store %arg8[%c0_6, %c0_7], %7 {strides = array<i32>} : memref<8x128xf32, #tpu.memory_space<vmem>>, vector<8x128xf32>,
    %c0_i32_8 = arith.constant 0 : i32
    %9 = arith.cmpi eq, %arg1, %c0_i32_8 : i32
    %10 = arith.extui %9 : i1 to i32
    %c0_i32_9 = arith.constant 0 : i32
    %11 = arith.cmpi ne, %10, %c0_i32_9 : i32
    scf.if %11 {
      %c0_10 = arith.constant 0 : index
      %c0_11 = arith.constant 0 : index
      %12 = vector.load %arg8[%c0_10, %c0_11] : memref<8x128xf32, #tpu.memory_space<vmem>>, vector<8x128xf32>
      %c0_12 = arith.constant 0 : index
      %c0_13 = arith.constant 0 : index
      %13 = vector.load %arg4[%c0_12, %c0_13] : memref<1x128xf32, #tpu.memory_space<vmem>>, vector<1x128xf32>
      %14 = vector.broadcast %13 : vector<1x128xf32> to vector<8x128xf32>
      %15 = arith.addf %12, %14 : vector<8x128xf32>
      %cst_14 = arith.constant 0.000000e+00 : f32
      %16 = vector.broadcast %cst_14 : f32 to vector<8x128xf32>
      %17 = arith.maximumf %15, %16 : vector<8x128xf32>
      %c0_15 = arith.constant 0 : index
      %c0_16 = arith.constant 0 : index
      %18 = vector.load %arg5[%c0_15, %c0_16] : memref<128x128xf32, #tpu.memory_space<vmem>>, vector<128x128xf32>
      %cst_17 = arith.constant dense<0.000000e+00> : vector<8x128xf32>
      %19 = tpu.matmul %17, %18, %cst_17 {dimension_numbers = #tpu.dot_dimension_numbers<[1], [0], [0], [1], [0, 0, 1, 1], [], []>} : vector<8x128xf32>, vector<128x128xf32>, vector<8x128xf32> -> vector<8x128xf32>
      %c0_18 = arith.constant 0 : index
      %c0_19 = arith.constant 0 : index
      %20 = vector.load %arg6[%c0_18, %c0_19] : memref<1x128xf32, #tpu.memory_space<vmem>>, vector<1x128xf32>
      %21 = vector.broadcast %20 : vector<1x128xf32> to vector<8x128xf32>
      %22 = arith.addf %19, %21 : vector<8x128xf32>
      %c0_20 = arith.constant 0 : index
      %c0_21 = arith.constant 0 : index
      %23 = vector.load %arg7[%c0_20, %c0_21] : memref<8x128xf32, #tpu.memory_space<vmem>>, vector<8x128xf32>
      tpu.vector_store %arg7[%c0_20, %c0_21], %22 {strides = array<i32>} : memref<8x128xf32, #tpu.memory_space<vmem>>, vector<8x128xf32>,
    } else {
    }
    return
  }
  func.func @transform_0(%arg0: i32, %arg1: i32) -> (i32, i32) {
    %c0_i32 = arith.constant 0 : i32
    return %arg0, %arg1 : i32, i32
  }
  func.func @transform_1(%arg0: i32, %arg1: i32) -> (i32, i32) {
    %c0_i32 = arith.constant 0 : i32
    %c0_i32_0 = arith.constant 0 : i32
    return %arg1, %c0_i32 : i32, i32
  }
  func.func @transform_2(%arg0: i32, %arg1: i32) -> (i32, i32) {
    %c0_i32 = arith.constant 0 : i32
    %c0_i32_0 = arith.constant 0 : i32
    %c0_i32_1 = arith.constant 0 : i32
    return %c0_i32, %c0_i32_0 : i32, i32
  }
  func.func @transform_3(%arg0: i32, %arg1: i32) -> (i32, i32) {
    %c0_i32 = arith.constant 0 : i32
    %c0_i32_0 = arith.constant 0 : i32
    %c0_i32_1 = arith.constant 0 : i32
    return %c0_i32, %c0_i32_0 : i32, i32
  }
  func.func @transform_4(%arg0: i32, %arg1: i32) -> (i32, i32) {
    %c0_i32 = arith.constant 0 : i32
    %c0_i32_0 = arith.constant 0 : i32
    %c0_i32_1 = arith.constant 0 : i32
    return %c0_i32, %c0_i32_0 : i32, i32
  }
  func.func @transform_5(%arg0: i32, %arg1: i32) -> (i32, i32) {
    %c0_i32 = arith.constant 0 : i32
    %c0_i32_0 = arith.constant 0 : i32
    return %arg0, %c0_i32 : i32, i32
  }
}

</mosaic_0001>

<llo_original>
// kernel: shared_encoder.1
$region0: #{shared_encoder.1}
  #allocation0 [shape = 'u32[]', space=smem, size = 0x4, offset = 0x4, fixed_abs, tag = 'smem constant byte address 0x4 - core index']
  #allocation1 [shape = 'u32[144,128]{1,0:T(1,128)}', space=vmem, size = 0x12000, scoped, tag = 'internal scratch']
  #allocation2 [shape = 'f32[8,128]{1,0:T(8,128)}', space=vmem, size = 0x1000, scoped, tag = 'scratch operand']
  %s0 = inlined_call_operand.vmem [shape: f32[8,32], index: 0, kind: input, shape index: {}]
  %s1 = inlined_call_operand.vmem [shape: f32[32,128], index: 1, kind: input, shape index: {}]
  %s2 = inlined_call_operand.vmem [shape: f32[1,128], index: 2, kind: input, shape index: {}]
  %s3 = inlined_call_operand.vmem [shape: f32[128,128], index: 3, kind: input, shape index: {}]
  %s4 = inlined_call_operand.vmem [shape: f32[1,128], index: 4, kind: input, shape index: {}]
  %s5 = inlined_call_operand.hbm [shape: f32[8,128], index: 5, kind: output, shape index: {}]
  %s6 = sld [smem:[#allocation0]]
  $region38: #{shared_encoder.1} parent=0
    _
  %s8 = ssub.s32 1, %s6
  %s9 = scalar_select 0, %s8, %s6
  $region1: #{shared_encoder.1} parent=0
    #allocation3 [shape = 'u8[4096]{0}', space=vmem, size = 0x1000, scoped, tag = 'output window, operand 0, single buffered']
    #allocation4 [shape = 's32[1]{0}', space=sflag, size = 0x4, scoped, tag = 'scoped memory for shared_encoder.1']
    %10 = vsyncpa [#allocation4], 0
    // Predicated region
    $region2: #{shared_encoder.1} parent=1 // pred_check
      _
    $region3: #{shared_encoder.1} parent=1 // pred_check_branch
      %12 = sbr.rel (0) target = $region5
    $region4: #{shared_encoder.1} parent=1 // pred_region
      _
    $region5: #{shared_encoder.1} parent=1 // pred_fallthru
      _
    // Predicated region
    $region6: #{shared_encoder.1} parent=1 // pred_check
      _
    $region7: #{shared_encoder.1} parent=1 // pred_check_branch
      %14 = sbr.rel (0) target = $region9
    $region8: #{shared_encoder.1} parent=1 // pred_region
      _
    $region9: #{shared_encoder.1} parent=1 // pred_fallthru
      _
    // Predicated region
    $region10: #{shared_encoder.1} parent=1 // pred_check
      _
    $region11: #{shared_encoder.1} parent=1 // pred_check_branch
      %16 = sbr.rel (0) target = $region13
    $region12: #{shared_encoder.1} parent=1 // pred_region
      _
    $region13: #{shared_encoder.1} parent=1 // pred_fallthru
      _
    // Predicated region
    $region14: #{shared_encoder.1} parent=1 // pred_check
      _
    $region15: #{shared_encoder.1} parent=1 // pred_check_branch
      %18 = sbr.rel (0) target = $region17
    $region16: #{shared_encoder.1} parent=1 // pred_region
      _
    $region17: #{shared_encoder.1} parent=1 // pred_fallthru
      _
    // Predicated region
    $region18: #{shared_encoder.1} parent=1 // pred_check
      _
    $region19: #{shared_encoder.1} parent=1 // pred_check_branch
      %20 = sbr.rel (0) target = $region21
    $region20: #{shared_encoder.1} parent=1 // pred_region
      _
    $region21: #{shared_encoder.1} parent=1 // pred_fallthru
      _
    %p21 = scmp.eq.s32.totalorder 0, 0
    // Predicated region
    $region22: #{shared_encoder.1} parent=1 // pred_check
      %p22 = pneg %p21
    $region23: #{shared_encoder.1} parent=1 // pred_check_branch
      %24 = sbr.rel (%p22) target = $region25
    $region24: #{shared_encoder.1} parent=1 // pred_region
      %25 = vst [vmem:[#allocation2] sm:$0xff] 0.0
    $region25: #{shared_encoder.1} parent=1 // pred_fallthru
      _
    %v26 = vld [vmem:[#allocation2] sm:$0xff]
    %v27 = vld [vmem:[%s0] sm:$0xff]
    %v28 = vld [vmem:[%s1] sm:$0xff]
    %v29 = vld [vmem:[%s1 + $0x8] sm:$0xff]
    %v30 = vld [vmem:[%s1 + $0x10] sm:$0xff]
    %v31 = vld [vmem:[%s1 + $0x18] sm:$0xff]
    %vm32 = vcmask 261120
    %v34 = vsel %vm32, %v27, 0
    %36 = vmatprep.subr.mxu0 0.0
    %37 = vmatpush1.msra.mxu0 %v28
    %38 = vmatprep.subr.mxu0 0.0
    %39 = vmatpush1.msra.mxu0 %v29
    %40 = vmatprep.subr.mxu0 0.0
    %41 = vmatpush1.msra.mxu0 %v30
    %42 = vmatprep.subr.mxu0 0.0
    %43 = vmatpush1.msra.mxu0 %v31
    %44 = vmatprep.subr.mxu0 0.0
    %45 = vmatpush1.msra.mxu0 0.0
    %46 = vmatprep.subr.mxu0 0.0
    %47 = vmatpush1.msra.mxu0 0.0
    %48 = vmatprep.subr.mxu0 0.0
    %49 = vmatpush1.msra.mxu0 0.0
    %50 = vmatprep.subr.mxu0 0.0
    %51 = vmatpush1.msra.mxu0 0.0
    %52 = vmatprep.subr.mxu0 0.0
    %53 = vmatpush1.msra.mxu0 0.0
    %54 = vmatprep.subr.mxu0 0.0
    %55 = vmatpush1.msra.mxu0 0.0
    %56 = vmatprep.subr.mxu0 0.0
    %57 = vmatpush1.msra.mxu0 0.0
    %58 = vmatprep.subr.mxu0 0.0
    %59 = vmatpush1.msra.mxu0 0.0
    %60 = vmatprep.subr.mxu0 0.0
    %61 = vmatpush1.msra.mxu0 0.0
    %62 = vmatprep.subr.mxu0 0.0
    %63 = vmatpush1.msra.mxu0 0.0
    %64 = vmatprep.subr.mxu0 0.0
    %65 = vmatpush1.msra.mxu0 0.0
    %66 = vmatprep.subr.mxu0 0.0
    %67 = vmatpush1.msra.mxu0 0.0
    %68 = vmatprep.subr.mxu0 0.0
    %69 = vmatpush1.msra.mxu0 0.0
    %70 = vmatprep.subr.mxu0 0.0
    %71 = vmatpush1.msra.mxu0 0.0
    %72 = vmatprep.subr.mxu0 0.0
    %73 = vmatpush1.msra.mxu0 0.0
    %74 = vmatprep.subr.mxu0 0.0
    %75 = vmatpush1.msra.mxu0 0.0
    %76 = vmatprep.subr.mxu0 0.0
    %77 = vmatpush1.msra.mxu0 0.0
    %78 = vmatprep.subr.mxu0 0.0
    %79 = vmatpush1.msra.mxu0 0.0
    %80 = vmatprep.subr.mxu0 0.0
    %81 = vmatpush1.msra.mxu0 0.0
    %82 = vmatprep.subr.mxu0 0.0
    %83 = vmatpush1.msra.mxu0 0.0
    %84 = vmatprep.subr.mxu0 0.0
    %85 = vmatpush1.msra.mxu0 0.0
    %86 = vmatprep.subr.mxu0 0.0
    %87 = vmatpush1.msra.mxu0 0.0
    %88 = vmatprep.subr.mxu0 0.0
    %89 = vmatpush1.msra.mxu0 0.0
    %90 = vmatprep.subr.mxu0 0.0
    %91 = vmatpush1.msra.mxu0 0.0
    %92 = vmatprep.subr.mxu0 0.0
    %93 = vmatpush1.msra.mxu0 0.0
    %94 = vmatprep.subr.mxu0 0.0
    %95 = vmatpush1.msra.mxu0 0.0
    %96 = vmatprep.subr.mxu0 0.0
    %97 = vmatpush1.msra.mxu0 0.0
    %98 = vmatprep.subr.mxu0 0.0
    %99 = vmatpush1.msra.mxu0 0.0
    %100 = vmatprep.mubr.f32.mxu0 0.0
    %101 = vmatmul.mubr.f32.gmra.mrb[0].mxu0 %v34
    %v102 = vpop.f32.mrb[0].mxu0
    %v103 = vadd.f32 0.0, %v102
    %v104 = vpop.f32.mrb[0].mxu0
    %105 = vdwg.mxu0
    %v106 = vadd.f32 %v26, %v103
    %107 = vst [vmem:[#allocation2] sm:$0xff] %v106
    // Predicated region
    $region26: #{shared_encoder.1} parent=1 // pred_check
      %p108 = pneg %p21
    $region27: #{shared_encoder.1} parent=1 // pred_check_branch
      %110 = sbr.rel (%p108) target = $region29
    $region28: #{shared_encoder.1} parent=1 // pred_region
      %v111 = vld [vmem:[#allocation2] sm:$0xff]
      %v112 = vld [vmem:[%s2] sm:$0x1]
      %v114 = vlaneseq
      %v115 = vshrl.u32 %v114, 7
      %v116 = vsub.s32 0, %v115
      %v117 = vrot.slane %v112, %v116
      %v119 = vadd.f32 %v111, %v117
      %v120 = vmax.f32 %v119, 0.0
      %v121 = vld [vmem:[%s3] sm:$0xff]
      %v122 = vld [vmem:[%s3 + $0x8] sm:$0xff]
      %v123 = vld [vmem:[%s3 + $0x10] sm:$0xff]
      %v124 = vld [vmem:[%s3 + $0x18] sm:$0xff]
      %v125 = vld [vmem:[%s3 + $0x20] sm:$0xff]
      %v126 = vld [vmem:[%s3 + $0x28] sm:$0xff]
      %v127 = vld [vmem:[%s3 + $0x30] sm:$0xff]
      %v128 = vld [vmem:[%s3 + $0x38] sm:$0xff]
      %v129 = vld [vmem:[%s3 + $0x40] sm:$0xff]
      %v130 = vld [vmem:[%s3 + $0x48] sm:$0xff]
      %v131 = vld [vmem:[%s3 + $0x50] sm:$0xff]
      %v132 = vld [vmem:[%s3 + $0x58] sm:$0xff]
      %v133 = vld [vmem:[%s3 + $0x60] sm:$0xff]
      %v134 = vld [vmem:[%s3 + $0x68] sm:$0xff]
      %v135 = vld [vmem:[%s3 + $0x70] sm:$0xff]
      %v136 = vld [vmem:[%s3 + $0x78] sm:$0xff]
      %v137 = vld [vmem:[%s4] sm:$0x1]
      %v139 = vlaneseq
      %v140 = vshrl.u32 %v139, 7
      %v141 = vsub.s32 0, %v140
      %v142 = vrot.slane %v137, %v141
      %144 = vmatprep.subr.mxu0 0.0
      %145 = vmatpush1.msra.mxu0 %v121
      %146 = vmatprep.subr.mxu0 0.0
      %147 = vmatpush1.msra.mxu0 %v122
      %148 = vmatprep.subr.mxu0 0.0
      %149 = vmatpush1.msra.mxu0 %v123
      %150 = vmatprep.subr.mxu0 0.0
      %151 = vmatpush1.msra.mxu0 %v124
      %152 = vmatprep.subr.mxu0 0.0
      %153 = vmatpush1.msra.mxu0 %v125
      %154 = vmatprep.subr.mxu0 0.0
      %155 = vmatpush1.msra.mxu0 %v126
      %156 = vmatprep.subr.mxu0 0.0
      %157 = vmatpush1.msra.mxu0 %v127
      %158 = vmatprep.subr.mxu0 0.0
      %159 = vmatpush1.msra.mxu0 %v128
      %160 = vmatprep.subr.mxu0 0.0
      %161 = vmatpush1.msra.mxu0 %v129
      %162 = vmatprep.subr.mxu0 0.0
      %163 = vmatpush1.msra.mxu0 %v130
      %164 = vmatprep.subr.mxu0 0.0
      %165 = vmatpush1.msra.mxu0 %v131
      %166 = vmatprep.subr.mxu0 0.0
      %167 = vmatpush1.msra.mxu0 %v132
      %168 = vmatprep.subr.mxu0 0.0
      %169 = vmatpush1.msra.mxu0 %v133
      %170 = vmatprep.subr.mxu0 0.0
      %171 = vmatpush1.msra.mxu0 %v134
      %172 = vmatprep.subr.mxu0 0.0
      %173 = vmatpush1.msra.mxu0 %v135
      %174 = vmatprep.subr.mxu0 0.0
      %175 = vmatpush1.msra.mxu0 %v136
      %176 = vmatprep.subr.mxu0 0.0
      %177 = vmatpush1.msra.mxu0 0.0
      %178 = vmatprep.subr.mxu0 0.0
      %179 = vmatpush1.msra.mxu0 0.0
      %180 = vmatprep.subr.mxu0 0.0
      %181 = vmatpush1.msra.mxu0 0.0
      %182 = vmatprep.subr.mxu0 0.0
      %183 = vmatpush1.msra.mxu0 0.0
      %184 = vmatprep.subr.mxu0 0.0
      %185 = vmatpush1.msra.mxu0 0.0
      %186 = vmatprep.subr.mxu0 0.0
      %187 = vmatpush1.msra.mxu0 0.0
      %188 = vmatprep.subr.mxu0 0.0
      %189 = vmatpush1.msra.mxu0 0.0
      %190 = vmatprep.subr.mxu0 0.0
      %191 = vmatpush1.msra.mxu0 0.0
      %192 = vmatprep.subr.mxu0 0.0
      %193 = vmatpush1.msra.mxu0 0.0
      %194 = vmatprep.subr.mxu0 0.0
      %195 = vmatpush1.msra.mxu0 0.0
      %196 = vmatprep.subr.mxu0 0.0
      %197 = vmatpush1.msra.mxu0 0.0
      %198 = vmatprep.subr.mxu0 0.0
      %199 = vmatpush1.msra.mxu0 0.0
      %200 = vmatprep.subr.mxu0 0.0
      %201 = vmatpush1.msra.mxu0 0.0
      %202 = vmatprep.subr.mxu0 0.0
      %203 = vmatpush1.msra.mxu0 0.0
      %204 = vmatprep.subr.mxu0 0.0
      %205 = vmatpush1.msra.mxu0 0.0
      %206 = vmatprep.subr.mxu0 0.0
      %207 = vmatpush1.msra.mxu0 0.0
      %208 = vmatprep.mubr.f32.mxu0 0.0
      %209 = vmatmul.mubr.f32.gmra.mrb[0].mxu0 %v120
      %v210 = vpop.f32.mrb[0].mxu0
      %v211 = vadd.f32 %v142, %v210
      %v212 = vpop.f32.mrb[0].mxu0
      %213 = vdwg.mxu0
      %214 = vst [vmem:[#allocation3] sm:$0xff] %v211
    $region29: #{shared_encoder.1} parent=1 // pred_fallthru
      _
    // Predicated region
    $region30: #{shared_encoder.1} parent=1 // pred_check
      _
    $region31: #{shared_encoder.1} parent=1 // pred_check_branch
      %216 = sbr.rel (0) target = $region33
    $region32: #{shared_encoder.1} parent=1 // pred_region
      %s218 = ssub.s32 128, 128
      %219 = vsyncadd [#allocation4], %s218
      %s221 = sshll.u32 [#allocation3], 4
      %s222 = int_to_ptr.vmem [resolvable:$true] %s221
      %224 = dma.vmem_to_hbm [thread:$0]  %s222, 128, %s5, [#allocation4]
    $region33: #{shared_encoder.1} parent=1 // pred_fallthru
      _
    // Predicated region
    $region34: #{shared_encoder.1} parent=1 // pred_check
      _
    $region35: #{shared_encoder.1} parent=1 // pred_check_branch
      %226 = sbr.rel (0) target = $region37
    $region36: #{shared_encoder.1} parent=1 // pred_region
      %227 = dma.done [#allocation4], 128
    $region37: #{shared_encoder.1} parent=1 // pred_fallthru
      _
    %228 = vsyncpa [#allocation4], 1

</llo_original>
